<compile_context>
chip_gen: v5e
topology: v5e:2x2
jax: 0.10.0
libtpu: 0.0.40
codegen_flags: <defaults>
</compile_context>

<pallas_src>
import functools

import jax
import jax.numpy as jnp
from jax.experimental import pallas as pl
from jax.experimental.pallas import tpu as pltpu

_VMEM_LIMIT = 48 * 1024 * 1024  # safe on v7x (64 MiB physical), plenty on v5e/v6e


def _attn_kernel(x_ref, wqkvT_ref, mask_ref, y_ref, *, compute_dtype, approx_recip):
    """Fused qkv projection + linear attention for a (BT, N, C) block.

    x_ref:     (BT, N, C)  float32 (cast to compute_dtype in-kernel)
    wqkvT_ref: (C, 3C)     compute_dtype  (= [Wq^T | scale*Wk^T | Wv^T])
    mask_ref:  (Dg, Dg)    compute_dtype 0/1 intra-group block-diagonal mask
    y_ref:     (BT, N, C)  output, natural head-concatenated channel layout
    """
    BT, N, C = x_ref.shape
    M = BT * N
    Dg = mask_ref.shape[0]          # head-group width (multiple of head_dim, divides C)
    NG = C // Dg
    cdt = compute_dtype

    mask_c = mask_ref[...]                       # (Dg, Dg) 0/1 in compute dtype (MXU operand)
    maskf = mask_c.astype(jnp.float32)           # exact 0/1 for masking the f32 attn blocks

    # One fused projection matmul for q, k (pre-scaled) and v; f32 x is cast here
    # (free VPU work under MXU cover) instead of a separate host-side cast pass.
    x2 = x_ref[...].reshape(M, C).astype(cdt)
    qkv = jnp.dot(x2, wqkvT_ref[...],
                  preferred_element_type=jnp.float32)           # (M, 3C) f32

    k3 = qkv[:, C:2 * C].reshape(BT, N, C)                      # (BT, N, C) f32
    v_c = qkv[:, 2 * C:].reshape(BT, N, C).astype(cdt)          # (BT, N, C)

    # softmax(scale * k^T, axis=-1) == softmax over the token axis of scale*k,
    # done column-wise on the whole block (scale already folded into Wk).
    kmax = jnp.max(k3, axis=1, keepdims=True)                   # (BT, 1, C)
    ek = jnp.exp(k3 - kmax)
    ksum = jnp.sum(ek, axis=1, keepdims=True)
    ksm_c = (ek * pl.reciprocal(ksum, approx=approx_recip)).astype(cdt)   # (BT, N, C)

    # Head-grouped block-diagonal attention: each group of width Dg (~MXU tile)
    # only pays Dg/C of the full masked-(C, C) MXU work.
    for g in range(NG):
        sl = slice(g * Dg, (g + 1) * Dg)

        # attn_g[b] = softmax_k_g[b]^T @ v_g[b]  -> (Dg, Dg); keep same-head blocks only.
        attn = jnp.einsum('bnc,bnd->bcd', ksm_c[:, :, sl], v_c[:, :, sl],
                          preferred_element_type=jnp.float32)   # (BT, Dg, Dg) f32
        attn = (attn * maskf).astype(cdt)

        # Per-head q softmax. Subtracting the group max is shift-invariant within
        # each head; the denominator is clamped so a fully-underflowed head can
        # never produce inf/NaN.
        q_g = qkv[:, sl]                                        # q occupies columns [0, C)
        qmax = jnp.max(q_g, axis=-1, keepdims=True)             # (M, 1)
        eq = jnp.exp(q_g - qmax)                                # (M, Dg) f32
        den = jnp.dot(eq.astype(cdt), mask_c,
                      preferred_element_type=jnp.float32)       # per-head sums, expanded
        den = jnp.maximum(den, 1e-30)

        # y_g[b] = softmax(q_g)[b] @ attn_g[b]; normalization applied after the
        # matmul (identical for block-diagonal attn since den is per-head).
        y = jnp.einsum('bnc,bcd->bnd',
                       eq.reshape(BT, N, Dg).astype(cdt), attn,
                       preferred_element_type=jnp.float32)      # (BT, N, Dg) f32
        y = y * pl.reciprocal(den.reshape(BT, N, Dg), approx=approx_recip)
        y_ref[:, :, sl] = y.astype(y_ref.dtype)


def _proj_kernel(y_ref, wpT_ref, bp_ref, o_ref):
    """Row-tiled output projection: o = y @ Wp^T + b (f32 accumulation)."""
    out = jnp.dot(y_ref[...], wpT_ref[...],
                  preferred_element_type=jnp.float32) + bp_ref[...]
    o_ref[...] = out.astype(o_ref.dtype)


def _pick_group_width(C, D):
    """Head-group width: multiple of D dividing C, targeting the MXU tile width."""
    target = 256                                  # v6e/v7x MXU tile; 2 tiles on v5e
    try:
        kind = jax.devices()[0].device_kind.lower()
        if "v5 lite" in kind or "v5e" in kind:
            target = 128                          # v5e MXU is 128 wide
    except Exception:
        pass
    if C <= target:
        return C
    best = D
    g = D
    while g <= target:
        if C % g == 0:
            best = g
        g += D
    return best


def _pick_batch_block(B, N, C, itemsize):
    """Batch elements per grid step for the attention kernel.

    Sized against an explicit VMEM budget (v7x only has 64 MiB physical) and
    forced to give >= 2 grid steps when B >= 2 so both v7x TensorCores get work.
    """
    budget = 40 * 1024 * 1024                     # headroom under the 48 MiB limit
    weight_bytes = 2 * C * (3 * C) * itemsize     # double-buffered fused qkv weight
    row_bytes = C * 48                            # x/y tiles + f32 intermediates per row (coarse)
    max_rows = min(1024, max(0, budget - weight_bytes) // row_bytes)
    bt = 1
    for cand in range(1, B + 1):
        if B % cand == 0 and cand * N <= max_rows:
            bt = cand
    if B >= 2:                                    # >= 2 parallel steps (v7x megacore)
        bt = min(bt, B // 2)
        while B % bt:
            bt -= 1
    return max(bt, 1)


def _pick_row_block(M):
    """Row tile for the projection kernel: fixed ~1024 target, >=2 steps, cdiv grid."""
    if M <= 16:
        return M
    rt = min(1024, 8 * ((M // 2 + 7) // 8))
    return max(8, rt)


@functools.partial(jax.jit, static_argnames=("num_heads", "use_bf16", "out_dtype"))
def linear_attention(x, wq, wk, wv, wp, bp, *, num_heads, scale,
                     use_bf16=True, out_dtype=None):
    """Pallas implementation of Linear_Attention.forward.

    x:  (B, N, C) float32
    wq, wk, wv, wp: (C, C) PyTorch-Linear-style weights (out, in); no q/k/v bias
    bp: (C,) proj bias
    out_dtype: optional output dtype (e.g. jnp.bfloat16 to halve final store traffic)
    """
    B, N, C = x.shape
    H = num_heads
    assert C % H == 0
    D = C // H
    cdt = jnp.bfloat16 if use_bf16 else jnp.float32
    itemsize = 2 if use_bf16 else 4
    odt = out_dtype if out_dtype is not None else x.dtype

    # Host-side glue: fused qkv weight (scale folded into Wk), transposed so the
    # kernel does plain x @ W^T, cast to the MXU input dtype.
    wqkvT = jnp.concatenate([wq.T, wk.T * scale, wv.T], axis=1).astype(cdt)   # (C, 3C)
    wpT = wp.T.astype(cdt)                                                    # (C, C)
    bias = bp.reshape(1, C).astype(jnp.float32)

    # Intra-group block-diagonal (same-head) mask: tiny (Dg, Dg) compute-dtype
    # operand; also acts as the "segmented ones" matrix for the q-softmax denoms.
    Dg = _pick_group_width(C, D)
    head_id = jnp.arange(Dg, dtype=jnp.int32) // D
    maskg = (head_id[:, None] == head_id[None, :]).astype(cdt)                # (Dg, Dg)

    bt = _pick_batch_block(B, N, C, itemsize)

    y_nat = pl.pallas_call(
        functools.partial(_attn_kernel, compute_dtype=cdt, approx_recip=use_bf16),
        out_shape=jax.ShapeDtypeStruct((B, N, C), cdt),
        grid=(B // bt,),
        in_specs=[
            pl.BlockSpec((bt, N, C), lambda b: (b, 0, 0)),
            pl.BlockSpec((C, 3 * C), lambda b: (0, 0)),
            pl.BlockSpec((Dg, Dg), lambda b: (0, 0)),
        ],
        out_specs=pl.BlockSpec((bt, N, C), lambda b: (b, 0, 0)),
        compiler_params=pltpu.CompilerParams(
            dimension_semantics=("parallel",),
            vmem_limit_bytes=_VMEM_LIMIT,
        ),
    )(x, wqkvT, maskg)

    # TODO(synk): the torch head/token-mixing reshape ((B,H,N,D) contiguous ->
    # (B,N,C)) is left to XLA between the two kernels (bf16, so 4*B*N*C bytes);
    # fusing it in-kernel requires a sublane<->lane relayout that is not worth the
    # lowering risk at arbitrary head_dim.
    y_mixed = jnp.transpose(y_nat.reshape(B, N, H, D), (0, 2, 1, 3)).reshape(B * N, C)

    M = B * N
    rt = _pick_row_block(M)
    out = pl.pallas_call(
        _proj_kernel,
        out_shape=jax.ShapeDtypeStruct((M, C), odt),
        grid=(pl.cdiv(M, rt),),
        in_specs=[
            pl.BlockSpec((rt, C), lambda r: (r, 0)),
            pl.BlockSpec((C, C), lambda r: (0, 0)),
            pl.BlockSpec((1, C), lambda r: (0, 0)),
        ],
        out_specs=pl.BlockSpec((rt, C), lambda r: (r, 0)),
        compiler_params=pltpu.CompilerParams(
            dimension_semantics=("parallel",),
            vmem_limit_bytes=_VMEM_LIMIT,
        ),
    )(y_mixed, wpT, bias)

    # proj_drop(p=0.0) and .view(B, -1, C) are identities here.
    return out.reshape(B, N, C)


def linear_attention_reference(x, wq, wk, wv, wp, bp, *, num_heads, scale):
    """Pure-JAX reference mirroring the PyTorch forward exactly."""
    B, N, C = x.shape
    H = num_heads
    D = C // H
    q = (x @ wq.T).reshape(B, N, H, D).transpose(0, 2, 1, 3)  # (B, H, N, D)
    k = (x @ wk.T).reshape(B, N, H, D).transpose(0, 2, 1, 3)
    v = (x @ wv.T).reshape(B, N, H, D).transpose(0, 2, 1, 3)
    kT = jnp.swapaxes(k, -2, -1) * scale                      # (B, H, D, N)
    attn = jax.nn.softmax(kT, axis=-1) @ v                    # (B, H, D, D)
    y = jax.nn.softmax(q, axis=-1) @ attn                     # (B, H, N, D)
    y = y.reshape(B, N, C)                                    # head/token-mixing reshape
    return y @ wp.T + bp


if __name__ == "__main__":
    # Small shapes consistent with the module: dim divisible by num_heads.
    B, N, C = 2, 16, 32
    num_heads = 8
    head_dim = C // num_heads
    scale = head_dim ** (-0.5)  # qk_scale=None default

    key = jax.random.PRNGKey(0)
    kx, kq, kk, kv, kp, kb = jax.random.split(key, 6)

    x = jax.random.normal(kx, (B, N, C), dtype=jnp.float32)
    wq = 0.05 * jax.random.normal(kq, (C, C), dtype=jnp.float32)
    wk = 0.05 * jax.random.normal(kk, (C, C), dtype=jnp.float32)
    wv = 0.05 * jax.random.normal(kv, (C, C), dtype=jnp.float32)
    wp = 0.05 * jax.random.normal(kp, (C, C), dtype=jnp.float32)
    bp = 0.05 * jax.random.normal(kb, (C,), dtype=jnp.float32)

    ref = linear_attention_reference(x, wq, wk, wv, wp, bp,
                                     num_heads=num_heads, scale=scale)

    # Exact-math path (f32 MXU inputs, exact reciprocal): tight check.
    out_f32 = linear_attention(x, wq, wk, wv, wp, bp,
                               num_heads=num_heads, scale=scale, use_bf16=False)
    out_f32 = jax.block_until_ready(out_f32)
    assert out_f32.shape == (B, N, C)
    assert jnp.allclose(out_f32, ref, atol=1e-4, rtol=1e-4), "f32 kernel mismatch vs reference"

    # Fast path (bf16 MXU inputs, f32 accumulation, approx reciprocal): loose check.
    out_bf16 = linear_attention(x, wq, wk, wv, wp, bp,
                                num_heads=num_heads, scale=scale, use_bf16=True)
    out_bf16 = jax.block_until_ready(out_bf16)
    assert out_bf16.shape == (B, N, C)
    assert jnp.allclose(out_bf16, ref, atol=2e-2, rtol=2e-2), "bf16 kernel mismatch vs reference"

    print("KERNEL_OK")
</pallas_src>

<mosaic_0001>
module attributes {stable_mosaic.version = 11 : i64} {
  func.func @_proj_kernel(%arg0: i32, %arg1: memref<16x32xf32, #tpu.memory_space<vmem>>, %arg2: memref<32x32xf32, #tpu.memory_space<vmem>>, %arg3: memref<1x32xf32, #tpu.memory_space<vmem>>, %arg4: memref<16x32xf32, #tpu.memory_space<vmem>>) attributes {dimension_semantics = [#tpu.dimension_semantics<parallel>], iteration_bounds = array<i64: 2>, scalar_prefetch = 0 : i64, scratch_operands = 0 : i64, tpu.core_type = #tpu.core_type<tc>, window_params = [{transform_indices = @transform_0, window_bounds = array<i64: 16, 32>}, {pipeline_mode = #tpu.pipeline_mode<synchronous>, transform_indices = @transform_1, window_bounds = array<i64: 32, 32>}, {pipeline_mode = #tpu.pipeline_mode<synchronous>, transform_indices = @transform_2, window_bounds = array<i64: 1, 32>}, {transform_indices = @transform_3, window_bounds = array<i64: 16, 32>}]} {
    %c0 = arith.constant 0 : index
    %c0_0 = arith.constant 0 : index
    %0 = vector.load %arg1[%c0, %c0_0] : memref<16x32xf32, #tpu.memory_space<vmem>>, vector<16x32xf32>
    %c0_1 = arith.constant 0 : index
    %c0_2 = arith.constant 0 : index
    %1 = vector.load %arg2[%c0_1, %c0_2] : memref<32x32xf32, #tpu.memory_space<vmem>>, vector<32x32xf32>
    %cst = arith.constant dense<0.000000e+00> : vector<16x32xf32>
    %2 = tpu.matmul %0, %1, %cst {dimension_numbers = #tpu.dot_dimension_numbers<[1], [0], [0], [1], [0, 0, 1, 1], [], []>} : vector<16x32xf32>, vector<32x32xf32>, vector<16x32xf32> -> vector<16x32xf32>
    %c0_3 = arith.constant 0 : index
    %c0_4 = arith.constant 0 : index
    %3 = vector.load %arg3[%c0_3, %c0_4] : memref<1x32xf32, #tpu.memory_space<vmem>>, vector<1x32xf32>
    %4 = vector.broadcast %3 : vector<1x32xf32> to vector<16x32xf32>
    %5 = arith.addf %2, %4 : vector<16x32xf32>
    %c0_5 = arith.constant 0 : index
    %c0_6 = arith.constant 0 : index
    %6 = vector.load %arg4[%c0_5, %c0_6] : memref<16x32xf32, #tpu.memory_space<vmem>>, vector<16x32xf32>
    tpu.vector_store %arg4[%c0_5, %c0_6], %5 {strides = array<i32>} : memref<16x32xf32, #tpu.memory_space<vmem>>, vector<16x32xf32>,
    return
  }
  func.func @transform_0(%arg0: i32) -> (i32, i32) {
    %c0_i32 = arith.constant 0 : i32
    %c0_i32_0 = arith.constant 0 : i32
    return %arg0, %c0_i32 : i32, i32
  }
  func.func @transform_1(%arg0: i32) -> (i32, i32) {
    %c0_i32 = arith.constant 0 : i32
    %c0_i32_0 = arith.constant 0 : i32
    %c0_i32_1 = arith.constant 0 : i32
    return %c0_i32, %c0_i32_0 : i32, i32
  }
  func.func @transform_2(%arg0: i32) -> (i32, i32) {
    %c0_i32 = arith.constant 0 : i32
    %c0_i32_0 = arith.constant 0 : i32
    %c0_i32_1 = arith.constant 0 : i32
    return %c0_i32, %c0_i32_0 : i32, i32
  }
  func.func @transform_3(%arg0: i32) -> (i32, i32) {
    %c0_i32 = arith.constant 0 : i32
    %c0_i32_0 = arith.constant 0 : i32
    return %arg0, %c0_i32 : i32, i32
  }
}

module attributes {stable_mosaic.version = 11 : i64} {
  func.func @_attn_kernel(%arg0: i32, %arg1: memref<1x16x32xf32, #tpu.memory_space<vmem>>, %arg2: memref<32x96xf32, #tpu.memory_space<vmem>>, %arg3: memref<32x32xf32, #tpu.memory_space<vmem>>, %arg4: memref<1x16x32xf32, #tpu.memory_space<vmem>>) attributes {dimension_semantics = [#tpu.dimension_semantics<parallel>], iteration_bounds = array<i64: 2>, scalar_prefetch = 0 : i64, scratch_operands = 0 : i64, tpu.core_type = #tpu.core_type<tc>, window_params = [{transform_indices = @transform_0, window_bounds = array<i64: 1, 16, 32>}, {pipeline_mode = #tpu.pipeline_mode<synchronous>, transform_indices = @transform_1, window_bounds = array<i64: 32, 96>}, {pipeline_mode = #tpu.pipeline_mode<synchronous>, transform_indices = @transform_2, window_bounds = array<i64: 32, 32>}, {transform_indices = @transform_3, window_bounds = array<i64: 1, 16, 32>}]} {
    %c0 = arith.constant 0 : index
    %c0_0 = arith.constant 0 : index
    %0 = vector.load %arg3[%c0, %c0_0] : memref<32x32xf32, #tpu.memory_space<vmem>>, vector<32x32xf32>
    %c0_1 = arith.constant 0 : index
    %c0_2 = arith.constant 0 : index
    %c0_3 = arith.constant 0 : index
    %1 = vector.load %arg1[%c0_1, %c0_2, %c0_3] : memref<1x16x32xf32, #tpu.memory_space<vmem>>, vector<1x16x32xf32>
    %2 = vector.shape_cast %1 : vector<1x16x32xf32> to vector<16x32xf32>
    %c0_4 = arith.constant 0 : index
    %c0_5 = arith.constant 0 : index
    %3 = vector.load %arg2[%c0_4, %c0_5] : memref<32x96xf32, #tpu.memory_space<vmem>>, vector<32x96xf32>
    %cst = arith.constant dense<0.000000e+00> : vector<16x96xf32>
    %4 = tpu.matmul %2, %3, %cst {dimension_numbers = #tpu.dot_dimension_numbers<[1], [0], [0], [1], [0, 0, 1, 1], [], []>} : vector<16x32xf32>, vector<32x96xf32>, vector<16x96xf32> -> vector<16x96xf32>
    %5 = vector.extract_strided_slice %4 {offsets = [0, 32], sizes = [16, 32], strides = [1, 1]} : vector<16x96xf32> to vector<16x32xf32>
    %6 = vector.shape_cast %5 : vector<16x32xf32> to vector<1x16x32xf32>
    %7 = vector.extract_strided_slice %4 {offsets = [0, 64], sizes = [16, 32], strides = [1, 1]} : vector<16x96xf32> to vector<16x32xf32>
    %8 = vector.shape_cast %7 : vector<16x32xf32> to vector<1x16x32xf32>
    %cst_6 = arith.constant dense<0xFF800000> : vector<1x32xf32>
    %9 = vector.multi_reduction <maximumf>, %6, %cst_6 [1] : vector<1x16x32xf32> to vector<1x32xf32>
    %10 = vector.shape_cast %9 : vector<1x32xf32> to vector<1x1x32xf32>
    %11 = vector.broadcast %10 : vector<1x1x32xf32> to vector<1x16x32xf32>
    %12 = arith.subf %6, %11 : vector<1x16x32xf32>
    %13 = math.exp %12 : vector<1x16x32xf32>
    %cst_7 = arith.constant dense<0.000000e+00> : vector<1x32xf32>
    %14 = vector.multi_reduction <add>, %13, %cst_7 [1] : vector<1x16x32xf32> to vector<1x32xf32>
    %15 = vector.shape_cast %14 : vector<1x32xf32> to vector<1x1x32xf32>
    %16 = tpu.reciprocal %15 : vector<1x1x32xf32> -> vector<1x1x32xf32>
    %17 = vector.broadcast %16 : vector<1x1x32xf32> to vector<1x16x32xf32>
    %18 = arith.mulf %13, %17 : vector<1x16x32xf32>
    "tpu.trace_start"() <{level = 10 : i32, message = "bnc,bnd->bcd"}> : () -> ()
    %cst_8 = arith.constant dense<0.000000e+00> : vector<1x32x32xf32>
    %19 = tpu.matmul %18, %8, %cst_8 {dimension_numbers = #tpu.dot_dimension_numbers<[1], [1], [2], [2], [0, 0, 0, 2, 1, 2], [0], [0]>} : vector<1x16x32xf32>, vector<1x16x32xf32>, vector<1x32x32xf32> -> vector<1x32x32xf32>
    "tpu.trace_stop"() : () -> ()
    %20 = vector.shape_cast %0 : vector<32x32xf32> to vector<1x32x32xf32>
    %21 = arith.mulf %19, %20 : vector<1x32x32xf32>
    %22 = vector.extract_strided_slice %4 {offsets = [0, 0], sizes = [16, 32], strides = [1, 1]} : vector<16x96xf32> to vector<16x32xf32>
    %cst_9 = arith.constant dense<0xFF800000> : vector<16xf32>
    %23 = vector.multi_reduction <maximumf>, %22, %cst_9 [1] : vector<16x32xf32> to vector<16xf32>
    %24 = vector.shape_cast %23 : vector<16xf32> to vector<16x1xf32>
    %25 = vector.broadcast %24 : vector<16x1xf32> to vector<16x32xf32>
    %26 = arith.subf %22, %25 : vector<16x32xf32>
    %27 = math.exp %26 : vector<16x32xf32>
    %cst_10 = arith.constant dense<0.000000e+00> : vector<16x32xf32>
    %28 = tpu.matmul %27, %0, %cst_10 {dimension_numbers = #tpu.dot_dimension_numbers<[1], [0], [0], [1], [0, 0, 1, 1], [], []>} : vector<16x32xf32>, vector<32x32xf32>, vector<16x32xf32> -> vector<16x32xf32>
    %cst_11 = arith.constant 1.000000e-30 : f32
    %29 = vector.broadcast %cst_11 : f32 to vector<16x32xf32>
    %30 = arith.maximumf %28, %29 : vector<16x32xf32>
    %31 = vector.shape_cast %27 : vector<16x32xf32> to vector<1x16x32xf32>
    "tpu.trace_start"() <{level = 10 : i32, message = "bnc,bcd->bnd"}> : () -> ()
    %cst_12 = arith.constant dense<0.000000e+00> : vector<1x16x32xf32>
    %32 = tpu.matmul %31, %21, %cst_12 {dimension_numbers = #tpu.dot_dimension_numbers<[2], [1], [1], [2], [0, 0, 0, 1, 1, 2], [0], [0]>} : vector<1x16x32xf32>, vector<1x32x32xf32>, vector<1x16x32xf32> -> vector<1x16x32xf32>
    "tpu.trace_stop"() : () -> ()
    %33 = vector.shape_cast %30 : vector<16x32xf32> to vector<1x16x32xf32>
    %34 = tpu.reciprocal %33 : vector<1x16x32xf32> -> vector<1x16x32xf32>
    %35 = arith.mulf %32, %34 : vector<1x16x32xf32>
    %c0_13 = arith.constant 0 : index
    %c0_14 = arith.constant 0 : index
    %c0_15 = arith.constant 0 : index
    %36 = vector.load %arg4[%c0_13, %c0_14, %c0_15] : memref<1x16x32xf32, #tpu.memory_space<vmem>>, vector<1x16x32xf32>
    tpu.vector_store %arg4[%c0_13, %c0_14, %c0_15], %35 {strides = array<i32>} : memref<1x16x32xf32, #tpu.memory_space<vmem>>, vector<1x16x32xf32>,
    return
  }
  func.func @transform_0(%arg0: i32) -> (i32, i32, i32) {
    %c0_i32 = arith.constant 0 : i32
    %c0_i32_0 = arith.constant 0 : i32
    %c0_i32_1 = arith.constant 0 : i32
    return %arg0, %c0_i32, %c0_i32_0 : i32, i32, i32
  }
  func.func @transform_1(%arg0: i32) -> (i32, i32) {
    %c0_i32 = arith.constant 0 : i32
    %c0_i32_0 = arith.constant 0 : i32
    %c0_i32_1 = arith.constant 0 : i32
    return %c0_i32, %c0_i32_0 : i32, i32
  }
  func.func @transform_2(%arg0: i32) -> (i32, i32) {
    %c0_i32 = arith.constant 0 : i32
    %c0_i32_0 = arith.constant 0 : i32
    %c0_i32_1 = arith.constant 0 : i32
    return %c0_i32, %c0_i32_0 : i32, i32
  }
  func.func @transform_3(%arg0: i32) -> (i32, i32, i32) {
    %c0_i32 = arith.constant 0 : i32
    %c0_i32_0 = arith.constant 0 : i32
    %c0_i32_1 = arith.constant 0 : i32
    return %arg0, %c0_i32, %c0_i32_0 : i32, i32, i32
  }
}

</mosaic_0001>

<llo_original>
// kernel: linear_attention.3
$region0: #{linear_attention.3}
  #allocation0 [shape = 'u32[]', space=smem, size = 0x4, offset = 0x4, fixed_abs, tag = 'smem constant byte address 0x4 - core index']
  #allocation1 [shape = 'u32[72,128]{1,0:T(1,128)}', space=vmem, size = 0x9000, scoped, tag = 'internal scratch']
  %s0 = inlined_call_operand.vmem [shape: f32[32,32], index: 0, kind: input, shape index: {}]
  %s1 = inlined_call_operand.vmem [shape: f32[32,32], index: 1, kind: input, shape index: {}]
  %s2 = inlined_call_operand.vmem [shape: f32[1,32], index: 2, kind: input, shape index: {}]
  %s3 = inlined_call_operand.hbm [shape: f32[32,32], index: 3, kind: output, shape index: {}]
  %s4 = sld [smem:[#allocation0]]
  $region45: #{linear_attention.3} parent=0
    _
  %s6 = ssub.s32 1, %s4
  %s7 = scalar_select 0, %s6, %s4
  $region1: #{linear_attention.3} parent=0
    #allocation2 [shape = 'u8[16384]{0}', space=vmem, size = 0x4000, scoped, tag = 'output window, operand 0']
    #allocation3 [shape = 's32[2]{0}', space=sflag, size = 0x8, scoped, tag = 'scoped memory for linear_attention.3']
    %8 = vsyncpa [#allocation3], 0
    %s9 = scalar_lea.sflag [#allocation3], 1
    %10 = vsyncpa %s9, 0
    loop: start=0, step=1, limit=4
    $region2: #{linear_attention.3} parent=1 // loop_pre_header
      _
    $region3: #{linear_attention.3} parent=1 // loop_header
      %s12 = sphi 0, %s16
      %p13 = scmp.ge.s32.totalorder %s12, 4
      %s22 = sphi 0, %s24
      %s25 = sphi 0, %s22
      %s26 = sphi 0, %s25
      %s42 = sphi 0, %s26
      %s46 = sphi 0, %s46
      %s48 = sphi 0, %s46
      %s49 = sphi 0, %s48
      %s63 = sphi 0, %s49
      %s67 = sphi 0, %s67
      %s69 = sphi 0, %s67
      %s70 = sphi 0, %s69
      %s84 = sphi 0, %s70
      %s90 = sphi 0, %s92
      %s93 = sphi 0, %s90
      %s94 = sphi 0, %s93
      %s110 = sphi 0, %s94
    $region4: #{linear_attention.3} parent=1 // loop_header_branch
      %15 = sbr.rel (%p13) target = $region8
    $region5: #{linear_attention.3} parent=1 // loop_body
      %s17 = ssub.s32 %s12, 1
      %s18 = ssub.s32 %s12, 2
      %s19 = sadd.s32 %s12, 1
      %s20 = ssub.s32 %s12, %s19
      %p21 = scmp.eq.s32.totalorder %s20, 0
      %s23 = sadd.s32 %s22, 1
      %s24 = scalar_select %p21, %s22, %s23
      %p27 = pneg %p21
      %p28 = scmp.eq.s32.totalorder %s12, 1
      %p29 = por %p27, %p28
      %p30 = scmp.ne.s32.totalorder %s22, %s25
      %p31 = scmp.eq.s32.totalorder %s12, 0
      %p32 = por %p30, %p31
      %p33 = scmp.ne.s32.totalorder %s22, %s25
      %p34 = scmp.eq.s32.totalorder %s17, 1
      %p35 = por %p33, %p34
      %p36 = scmp.ne.s32.totalorder %s25, %s26
      %p37 = scmp.eq.s32.totalorder %s17, 0
      %p38 = por %p36, %p37
      %p39 = scmp.ne.s32.totalorder %s25, %s26
      %p40 = scmp.eq.s32.totalorder %s18, 1
      %p41 = por %p39, %p40
      %p43 = scmp.ne.s32.totalorder %s26, %s42
      %p44 = scmp.eq.s32.totalorder %s18, 0
      %p45 = por %p43, %p44
      %s47 = sadd.s32 %s46, 1
      %p50 = scmp.eq.s32.totalorder %s12, 1
      %p51 = scmp.ne.s32.totalorder %s46, %s48
      %p52 = scmp.eq.s32.totalorder %s12, 0
      %p53 = por %p51, %p52
      %p54 = scmp.ne.s32.totalorder %s46, %s48
      %p55 = scmp.eq.s32.totalorder %s17, 1
      %p56 = por %p54, %p55
      %p57 = scmp.ne.s32.totalorder %s48, %s49
      %p58 = scmp.eq.s32.totalorder %s17, 0
      %p59 = por %p57, %p58
      %p60 = scmp.ne.s32.totalorder %s48, %s49
      %p61 = scmp.eq.s32.totalorder %s18, 1
      %p62 = por %p60, %p61
      %p64 = scmp.ne.s32.totalorder %s49, %s63
      %p65 = scmp.eq.s32.totalorder %s18, 0
      %p66 = por %p64, %p65
      %s68 = sadd.s32 %s67, 1
      %p71 = scmp.eq.s32.totalorder %s12, 1
      %p72 = scmp.ne.s32.totalorder %s67, %s69
      %p73 = scmp.eq.s32.totalorder %s12, 0
      %p74 = por %p72, %p73
      %p75 = scmp.ne.s32.totalorder %s67, %s69
      %p76 = scmp.eq.s32.totalorder %s17, 1
      %p77 = por %p75, %p76
      %p78 = scmp.ne.s32.totalorder %s69, %s70
      %p79 = scmp.eq.s32.totalorder %s17, 0
      %p80 = por %p78, %p79
      %p81 = scmp.ne.s32.totalorder %s69, %s70
      %p82 = scmp.eq.s32.totalorder %s18, 1
      %p83 = por %p81, %p82
      %p85 = scmp.ne.s32.totalorder %s70, %s84
      %p86 = scmp.eq.s32.totalorder %s18, 0
      %p87 = por %p85, %p86
      %s88 = ssub.s32 %s12, %s19
      %p89 = scmp.eq.s32.totalorder %s88, 0
      %s91 = sadd.s32 %s90, 1
      %s92 = scalar_select %p89, %s90, %s91
      %p95 = pneg %p89
      %p96 = scmp.eq.s32.totalorder %s12, 1
      %p97 = por %p95, %p96
      %p98 = scmp.ne.s32.totalorder %s90, %s93
      %p99 = scmp.eq.s32.totalorder %s12, 0
      %p100 = por %p98, %p99
      %p101 = scmp.ne.s32.totalorder %s90, %s93
      %p102 = scmp.eq.s32.totalorder %s17, 1
      %p103 = por %p101, %p102
      %p104 = scmp.ne.s32.totalorder %s93, %s94
      %p105 = scmp.eq.s32.totalorder %s17, 0
      %p106 = por %p104, %p105
      %p107 = scmp.ne.s32.totalorder %s93, %s94
      %p108 = scmp.eq.s32.totalorder %s18, 1
      %p109 = por %p107, %p108
      %p111 = scmp.ne.s32.totalorder %s94, %s110
      %p112 = scmp.eq.s32.totalorder %s18, 0
      %p113 = por %p111, %p112
      %p114 = scmp.le.s32.totalorder 1, %s12
      %p115 = scmp.lt.s32.totalorder %s12, 3
      %p116 = pnand %p114, %p115
      %p117 = pneg %p116
      // Predicated region
      $region9: #{linear_attention.3} parent=5 // pred_check
        _
      $region10: #{linear_attention.3} parent=5 // pred_check_branch
        %119 = sbr.rel (%p116) target = $region12
      $region11: #{linear_attention.3} parent=5 // pred_region
        %s120 = ssub.s32 %s12, 1
        // Predicated region
        $region13: #{linear_attention.3} parent=11 // pred_check
          %p121 = pneg %p59
        $region14: #{linear_attention.3} parent=11 // pred_check_branch
          %123 = sbr.rel (%p121) target = $region16
        $region15: #{linear_attention.3} parent=11 // pred_region
          _
        $region16: #{linear_attention.3} parent=11 // pred_fallthru
          _
        // Predicated region
        $region17: #{linear_attention.3} parent=11 // pred_check
          %p124 = pneg %p80
        $region18: #{linear_attention.3} parent=11 // pred_check_branch
          %126 = sbr.rel (%p124) target = $region20
        $region19: #{linear_attention.3} parent=11 // pred_region
          _
        $region20: #{linear_attention.3} parent=11 // pred_fallthru
          _
      $region12: #{linear_attention.3} parent=5 // pred_fallthru
        _
      %p127 = scmp.lt.s32.totalorder %s12, 2
      // Predicated region
      $region21: #{linear_attention.3} parent=5 // pred_check
        %p128 = pneg %p127
      $region22: #{linear_attention.3} parent=5 // pred_check_branch
        %130 = sbr.rel (%p128) target = $region24
      $region23: #{linear_attention.3} parent=5 // pred_region
        // Predicated region
        $region25: #{linear_attention.3} parent=23 // pred_check
          %p131 = pneg %p32
        $region26: #{linear_attention.3} parent=23 // pred_check_branch
          %133 = sbr.rel (%p131) target = $region28
        $region27: #{linear_attention.3} parent=23 // pred_region
          %s134 = smul.u32 2, %s12
          %p135 = scmp.lt.s32.totalorder %s134, 3
          %s136 = scalar_select %p135, %s134, 3
          %s137 = smul.addr %s136, 8
          %s138 = scalar_lea.vmem %s0, %s137
          %s139 = smul.u32 2, %s12
        $region28: #{linear_attention.3} parent=23 // pred_fallthru
          _
      $region24: #{linear_attention.3} parent=5 // pred_fallthru
        _
      %p140 = scmp.le.s32.totalorder 1, %s12
      %p141 = scmp.lt.s32.totalorder %s12, 3
      %p142 = pnand %p140, %p141
      %p143 = pneg %p142
      // Predicated region
      $region29: #{linear_attention.3} parent=5 // pred_check
        _
      $region30: #{linear_attention.3} parent=5 // pred_check_branch
        %145 = sbr.rel (%p142) target = $region32
      $region31: #{linear_attention.3} parent=5 // pred_region
        %s146 = ssub.s32 %s12, 1
        %s147 = smul.u32 2, %s17
        %p148 = scmp.lt.s32.totalorder %s147, 3
        %s149 = scalar_select %p148, %s147, 3
        %s150 = smul.addr %s149, 8
        %s151 = scalar_lea.vmem %s0, %s150
        %p152 = pneg %p38
        %p153 = pneg %p35
        %p154 = pneg %p59
        %p155 = pneg %p56
        %p156 = pneg %p80
        %p157 = pneg %p77
        %p158 = pneg %p106
        %p159 = pneg %p103
        %s160 = sand.u32 %s93, 1
        %s161 = scalar_lea.sflag [#allocation3], %s160
        %s162 = sand.u32 %s93, 1
        %s163 = smul.addr %s162, 16
        %s164 = scalar_lea.vmem [#allocation2], %s163
        %s165 = smul.u32 2, %s17
        %p166 = scmp.lt.s32.totalorder %s165, 3
        %s167 = scalar_select %p166, %s165, 3
        %s168 = smul.addr %s167, 8
        %s169 = scalar_lea.vmem %s0, %s168
        %s170 = smul.u32 2, %s17
        %s171 = smul.u32 2, %s17
        %v172 = vld [vmem:[%s169] sm:$0xff]
        %v173 = vld [vmem:[%s169 + $0x8] sm:$0xff]
        %v174 = vld [vmem:[%s1] sm:$0xff]
        %v175 = vld [vmem:[%s1 + $0x8] sm:$0xff]
        %v176 = vld [vmem:[%s1 + $0x10] sm:$0xff]
        %v177 = vld [vmem:[%s1 + $0x18] sm:$0xff]
        %v178 = vld [vmem:[%s2] sm:$0x1]
        %v180 = vperm.slane %v178, 0
        %vm182 = vcmask 261120
        %v184 = vsel %vm182, %v172, 0
        %v187 = vsel %vm182, %v173, 0
        %189 = vmatpush.msra.mxu0 0.0
        %190 = vmatpush.msra.mxu0 0.0
        %191 = vmatpush.msra.mxu0 0.0
        %192 = vmatpush.msra.mxu0 0.0
        %193 = vmatpush.msra.mxu0 0.0
        %194 = vmatpush.msra.mxu0 0.0
        %195 = vmatpush.msra.mxu0 0.0
        %196 = vmatpush.msra.mxu0 0.0
        %197 = vmatpush.msra.mxu0 0.0
        %198 = vmatpush.msra.mxu0 0.0
        %199 = vmatpush.msra.mxu0 0.0
        %200 = vmatpush.msra.mxu0 0.0
        %201 = vmatpush.msra.mxu0 %v177
        %202 = vmatpush.msra.mxu0 %v176
        %203 = vmatpush.msra.mxu0 %v175
        %204 = vmatpush.msra.mxu0 %v174
        %205 = vmatmul.f32.gmra.mxu0 %v184
        %v206 = vpop.f32.mrf.mxu0
        %v207 = vadd.f32 %v180, %v206
        %208 = vmatmul.f32.gmra.mxu0 %v187
        %v209 = vpop.f32.mrf.mxu0
        %v210 = vadd.f32 %v180, %v209
        %211 = vdwg.mxu0
        %212 = vst.msk [vmem:[%s164] sm:$0xff] %vm182, %v207
        %213 = vst.msk [vmem:[%s164 + $0x8] sm:$0xff] %vm182, %v210
        %s214 = sand.u32 %s93, 1
        %s215 = scalar_lea.sflag [#allocation3], %s214
        %s216 = sand.u32 %s93, 1
        %s217 = smul.addr %s216, 16
        %s218 = scalar_lea.vmem [#allocation2], %s217
        // Predicated region
        $region33: #{linear_attention.3} parent=31 // pred_check
          %p219 = pneg %p103
        $region34: #{linear_attention.3} parent=31 // pred_check_branch
          %221 = sbr.rel (%p219) target = $region36
        $region35: #{linear_attention.3} parent=31 // pred_region
          %s222 = smul.u32 2, %s17
          %224 = vsyncadd %s215, 0
          %s225 = smul.addr %s222, 8
          %s226 = scalar_lea.hbm %s3, %s225
          %s227 = sshll.u32 %s218, 4
          %s228 = int_to_ptr.vmem [resolvable:$true] %s227
          %s229 = sshll.u32 %s226, 4
          %s230 = int_to_ptr.hbm [resolvable:$true] %s229
          %235 = dma.vmem_to_hbm [thread:$0]  %s228, 256, %s230, %s215, 128, 128, 8
        $region36: #{linear_attention.3} parent=31 // pred_fallthru
          _
      $region32: #{linear_attention.3} parent=5 // pred_fallthru
        _
      %p236 = scmp.le.s32.totalorder 2, %s12
      // Predicated region
      $region37: #{linear_attention.3} parent=5 // pred_check
        %p237 = pneg %p236
      $region38: #{linear_attention.3} parent=5 // pred_check_branch
        %239 = sbr.rel (%p237) target = $region40
      $region39: #{linear_attention.3} parent=5 // pred_region
        %s240 = ssub.s32 %s12, 2
        // Predicated region
        $region41: #{linear_attention.3} parent=39 // pred_check
          %p241 = pneg %p109
        $region42: #{linear_attention.3} parent=39 // pred_check_branch
          %243 = sbr.rel (%p241) target = $region44
        $region43: #{linear_attention.3} parent=39 // pred_region
          %s244 = sand.u32 %s94, 1
          %s245 = scalar_lea.sflag [#allocation3], %s244
          %s246 = sand.u32 %s94, 1
          %s247 = smul.addr %s246, 16
          %s248 = scalar_lea.vmem [#allocation2], %s247
          %250 = dma.done %s245, 256
        $region44: #{linear_attention.3} parent=39 // pred_fallthru
          _
      $region40: #{linear_attention.3} parent=5 // pred_fallthru
        _
    $region6: #{linear_attention.3} parent=1 // loop_footer
      %s16 = sadd.s32 1, %s12
    $region7: #{linear_attention.3} parent=1 // loop_footer_branch
      %11 = sbr.rel target = $region3
    $region8: #{linear_attention.3} parent=1 // loop_exit
      _
    %251 = vsyncpa [#allocation3], 1
    %s252 = scalar_lea.sflag [#allocation3], 1
    %253 = vsyncpa %s252, 1

// kernel: linear_attention.2
$region0: #{linear_attention.2}
  #allocation0 [shape = 'u32[]', space=smem, size = 0x4, offset = 0x4, fixed_abs, tag = 'smem constant byte address 0x4 - core index']
  #allocation1 [shape = 'u32[72,128]{1,0:T(1,128)}', space=vmem, size = 0x9000, scoped, tag = 'internal scratch']
  %s0 = inlined_call_operand.vmem [shape: f32[2,16,32], index: 0, kind: input, shape index: {}]
  %s1 = inlined_call_operand.vmem [shape: f32[32,96], index: 1, kind: input, shape index: {}]
  %s2 = inlined_call_operand.vmem [shape: f32[32,32], index: 2, kind: input, shape index: {}]
  %s3 = inlined_call_operand.vmem [shape: f32[2,16,32], index: 3, kind: output, shape index: {}]
  %s4 = sld [smem:[#allocation0]]
  $region45: #{linear_attention.2} parent=0
    _
  %s6 = ssub.s32 1, %s4
  %s7 = scalar_select 0, %s6, %s4
  loop: start=0, step=1, limit=4
  $region2: #{linear_attention.2} parent=0 // loop_pre_header
    _
  $region3: #{linear_attention.2} parent=0 // loop_header
    %s9 = sphi 0, %s13
    %p10 = scmp.ge.s32.totalorder %s9, 4
    %s19 = sphi 0, %s21
    %s22 = sphi 0, %s19
    %s23 = sphi 0, %s22
    %s39 = sphi 0, %s23
    %s43 = sphi 0, %s43
    %s45 = sphi 0, %s43
    %s46 = sphi 0, %s45
    %s60 = sphi 0, %s46
    %s64 = sphi 0, %s64
    %s66 = sphi 0, %s64
    %s67 = sphi 0, %s66
    %s81 = sphi 0, %s67
    %s87 = sphi 0, %s89
    %s90 = sphi 0, %s87
    %s91 = sphi 0, %s90
    %s107 = sphi 0, %s91
  $region4: #{linear_attention.2} parent=0 // loop_header_branch
    %12 = sbr.rel (%p10) target = $region8
  $region5: #{linear_attention.2} parent=0 // loop_body
    %s14 = ssub.s32 %s9, 1
    %s15 = ssub.s32 %s9, 2
    %s16 = sadd.s32 %s9, 1
    %s17 = ssub.s32 %s9, %s16
    %p18 = scmp.eq.s32.totalorder %s17, 0
    %s20 = sadd.s32 %s19, 1
    %s21 = scalar_select %p18, %s19, %s20
    %p24 = pneg %p18
    %p25 = scmp.eq.s32.totalorder %s9, 1
    %p26 = por %p24, %p25
    %p27 = scmp.ne.s32.totalorder %s19, %s22
    %p28 = scmp.eq.s32.totalorder %s9, 0
    %p29 = por %p27, %p28
    %p30 = scmp.ne.s32.totalorder %s19, %s22
    %p31 = scmp.eq.s32.totalorder %s14, 1
    %p32 = por %p30, %p31
    %p33 = scmp.ne.s32.totalorder %s22, %s23
    %p34 = scmp.eq.s32.totalorder %s14, 0
    %p35 = por %p33, %p34
    %p36 = scmp.ne.s32.totalorder %s22, %s23
    %p37 = scmp.eq.s32.totalorder %s15, 1
    %p38 = por %p36, %p37
    %p40 = scmp.ne.s32.totalorder %s23, %s39
    %p41 = scmp.eq.s32.totalorder %s15, 0
    %p42 = por %p40, %p41
    %s44 = sadd.s32 %s43, 1
    %p47 = scmp.eq.s32.totalorder %s9, 1
    %p48 = scmp.ne.s32.totalorder %s43, %s45
    %p49 = scmp.eq.s32.totalorder %s9, 0
    %p50 = por %p48, %p49
    %p51 = scmp.ne.s32.totalorder %s43, %s45
    %p52 = scmp.eq.s32.totalorder %s14, 1
    %p53 = por %p51, %p52
    %p54 = scmp.ne.s32.totalorder %s45, %s46
    %p55 = scmp.eq.s32.totalorder %s14, 0
    %p56 = por %p54, %p55
    %p57 = scmp.ne.s32.totalorder %s45, %s46
    %p58 = scmp.eq.s32.totalorder %s15, 1
    %p59 = por %p57, %p58
    %p61 = scmp.ne.s32.totalorder %s46, %s60
    %p62 = scmp.eq.s32.totalorder %s15, 0
    %p63 = por %p61, %p62
    %s65 = sadd.s32 %s64, 1
    %p68 = scmp.eq.s32.totalorder %s9, 1
    %p69 = scmp.ne.s32.totalorder %s64, %s66
    %p70 = scmp.eq.s32.totalorder %s9, 0
    %p71 = por %p69, %p70
    %p72 = scmp.ne.s32.totalorder %s64, %s66
    %p73 = scmp.eq.s32.totalorder %s14, 1
    %p74 = por %p72, %p73
    %p75 = scmp.ne.s32.totalorder %s66, %s67
    %p76 = scmp.eq.s32.totalorder %s14, 0
    %p77 = por %p75, %p76
    %p78 = scmp.ne.s32.totalorder %s66, %s67
    %p79 = scmp.eq.s32.totalorder %s15, 1
    %p80 = por %p78, %p79
    %p82 = scmp.ne.s32.totalorder %s67, %s81
    %p83 = scmp.eq.s32.totalorder %s15, 0
    %p84 = por %p82, %p83
    %s85 = ssub.s32 %s9, %s16
    %p86 = scmp.eq.s32.totalorder %s85, 0
    %s88 = sadd.s32 %s87, 1
    %s89 = scalar_select %p86, %s87, %s88
    %p92 = pneg %p86
    %p93 = scmp.eq.s32.totalorder %s9, 1
    %p94 = por %p92, %p93
    %p95 = scmp.ne.s32.totalorder %s87, %s90
    %p96 = scmp.eq.s32.totalorder %s9, 0
    %p97 = por %p95, %p96
    %p98 = scmp.ne.s32.totalorder %s87, %s90
    %p99 = scmp.eq.s32.totalorder %s14, 1
    %p100 = por %p98, %p99
    %p101 = scmp.ne.s32.totalorder %s90, %s91
    %p102 = scmp.eq.s32.totalorder %s14, 0
    %p103 = por %p101, %p102
    %p104 = scmp.ne.s32.totalorder %s90, %s91
    %p105 = scmp.eq.s32.totalorder %s15, 1
    %p106 = por %p104, %p105
    %p108 = scmp.ne.s32.totalorder %s91, %s107
    %p109 = scmp.eq.s32.totalorder %s15, 0
    %p110 = por %p108, %p109
    %p111 = scmp.le.s32.totalorder 1, %s9
    %p112 = scmp.lt.s32.totalorder %s9, 3
    %p113 = pnand %p111, %p112
    %p114 = pneg %p113
    // Predicated region
    $region9: #{linear_attention.2} parent=5 // pred_check
      _
    $region10: #{linear_attention.2} parent=5 // pred_check_branch
      %116 = sbr.rel (%p113) target = $region12
    $region11: #{linear_attention.2} parent=5 // pred_region
      %s117 = ssub.s32 %s9, 1
      // Predicated region
      $region13: #{linear_attention.2} parent=11 // pred_check
        %p118 = pneg %p56
      $region14: #{linear_attention.2} parent=11 // pred_check_branch
        %120 = sbr.rel (%p118) target = $region16
      $region15: #{linear_attention.2} parent=11 // pred_region
        _
      $region16: #{linear_attention.2} parent=11 // pred_fallthru
        _
      // Predicated region
      $region17: #{linear_attention.2} parent=11 // pred_check
        %p121 = pneg %p77
      $region18: #{linear_attention.2} parent=11 // pred_check_branch
        %123 = sbr.rel (%p121) target = $region20
      $region19: #{linear_attention.2} parent=11 // pred_region
        _
      $region20: #{linear_attention.2} parent=11 // pred_fallthru
        _
    $region12: #{linear_attention.2} parent=5 // pred_fallthru
      _
    %p124 = scmp.lt.s32.totalorder %s9, 2
    // Predicated region
    $region21: #{linear_attention.2} parent=5 // pred_check
      %p125 = pneg %p124
    $region22: #{linear_attention.2} parent=5 // pred_check_branch
      %127 = sbr.rel (%p125) target = $region24
    $region23: #{linear_attention.2} parent=5 // pred_region
      // Predicated region
      $region25: #{linear_attention.2} parent=23 // pred_check
        %p128 = pneg %p29
      $region26: #{linear_attention.2} parent=23 // pred_check_branch
        %130 = sbr.rel (%p128) target = $region28
      $region27: #{linear_attention.2} parent=23 // pred_region
        %p131 = scmp.lt.s32.totalorder %s9, 1
        %s132 = scalar_select %p131, %s9, 1
        %s133 = smul.addr %s132, 2
        %s134 = smul.addr %s133, 8
        %s135 = scalar_lea.vmem %s0, %s134
      $region28: #{linear_attention.2} parent=23 // pred_fallthru
        _
    $region24: #{linear_attention.2} parent=5 // pred_fallthru
      _
    %p136 = scmp.le.s32.totalorder 1, %s9
    %p137 = scmp.lt.s32.totalorder %s9, 3
    %p138 = pnand %p136, %p137
    %p139 = pneg %p138
    // Predicated region
    $region29: #{linear_attention.2} parent=5 // pred_check
      _
    $region30: #{linear_attention.2} parent=5 // pred_check_branch
      %141 = sbr.rel (%p138) target = $region32
    $region31: #{linear_attention.2} parent=5 // pred_region
      %s142 = ssub.s32 %s9, 1
      %p143 = scmp.lt.s32.totalorder %s14, 1
      %s144 = scalar_select %p143, %s14, 1
      %s145 = smul.addr %s144, 2
      %s146 = smul.addr %s145, 8
      %s147 = scalar_lea.vmem %s0, %s146
      %p148 = pneg %p35
      %p149 = pneg %p32
      %p150 = pneg %p56
      %p151 = pneg %p53
      %p152 = pneg %p77
      %p153 = pneg %p74
      %p154 = pneg %p103
      %p155 = pneg %p100
      %p156 = scmp.lt.s32.totalorder %s14, 1
      %s157 = scalar_select %p156, %s14, 1
      %s158 = smul.addr %s157, 2
      %s159 = smul.addr %s158, 8
      %s160 = scalar_lea.vmem %s3, %s159
      %p161 = scmp.lt.s32.totalorder %s14, 1
      %s162 = scalar_select %p161, %s14, 1
      %s163 = smul.addr %s162, 2
      %s164 = smul.addr %s163, 8
      %s165 = scalar_lea.vmem %s0, %s164
      %p166 = scmp.lt.s32.totalorder %s14, 1
      %s167 = scalar_select %p166, %s14, 1
      %s168 = smul.addr %s167, 2
      %s169 = smul.addr %s168, 8
      %s170 = scalar_lea.vmem %s3, %s169
      %v171 = vld [vmem:[%s2] sm:$0xff]
      %v172 = vld [vmem:[%s2 + $0x8] sm:$0xff]
      %v173 = vld [vmem:[%s2 + $0x10] sm:$0xff]
      %v174 = vld [vmem:[%s2 + $0x18] sm:$0xff]
      %v175 = vld [vmem:[%s165] sm:$0xff]
      %v176 = vld [vmem:[%s165 + $0x8] sm:$0xff]
      %v177 = vld [vmem:[%s1] sm:$0xff]
      %v178 = vld [vmem:[%s1 + $0x8] sm:$0xff]
      %v179 = vld [vmem:[%s1 + $0x10] sm:$0xff]
      %v180 = vld [vmem:[%s1 + $0x18] sm:$0xff]
      %vm181 = vcmask 261120
      %v183 = vsel %vm181, %v175, 0
      %v186 = vsel %vm181, %v176, 0
      %188 = vmatpush.msra.mxu0 0.0
      %189 = vmatpush.msra.mxu0 0.0
      %190 = vmatpush.msra.mxu0 0.0
      %191 = vmatpush.msra.mxu0 0.0
      %192 = vmatpush.msra.mxu0 0.0
      %193 = vmatpush.msra.mxu0 0.0
      %194 = vmatpush.msra.mxu0 0.0
      %195 = vmatpush.msra.mxu0 0.0
      %196 = vmatpush.msra.mxu0 0.0
      %197 = vmatpush.msra.mxu0 0.0
      %198 = vmatpush.msra.mxu0 0.0
      %199 = vmatpush.msra.mxu0 0.0
      %200 = vmatpush.msra.mxu0 %v180
      %201 = vmatpush.msra.mxu0 %v179
      %202 = vmatpush.msra.mxu0 %v178
      %203 = vmatpush.msra.mxu0 %v177
      %204 = vmatmul.f32.gmra.mxu0 %v183
      %v205 = vpop.f32.mrf.mxu0
      %v206 = vadd.f32 0.0, %v205
      %207 = vmatmul.f32.gmra.mxu0 %v186
      %v208 = vpop.f32.mrf.mxu0
      %v209 = vadd.f32 0.0, %v208
      %210 = vdwg.mxu0
      %vm211 = vcmask 523520
      %v212 = vsel %vm211, %v206, -inf
      %v213 = vsel %vm211, %v209, -inf
      %v214 = vmax.f32 %v212, %v213
      %v215 = vrot.slane %v214, 4
      %v216 = vmax.f32 %v214, %v215
      %v217 = vrot.slane %v216, 2
      %v218 = vmax.f32 %v216, %v217
      %v219 = vrot.slane %v218, 1
      %v220 = vmax.f32 %v218, %v219
      %v221 = vsub.f32 %v206, %v220
      %v222 = vsub.f32 %v209, %v220
      %v223 = vmul.f32 %v221, 1.442695
      %v224 = vpow.pop %v223
      %v225 = vmul.f32 %v222, 1.442695
      %v226 = vpow.pop %v225
      %v227 = vsel %vm211, %v224, 0.0
      %v228 = vsel %vm211, %v226, 0.0
      %v229 = vadd.f32 %v227, %v228
      %v230 = vrot.slane %v229, 4
      %v231 = vadd.f32 %v229, %v230
      %v232 = vrot.slane %v231, 2
      %v233 = vadd.f32 %v231, %v232
      %v234 = vrot.slane %v233, 1
      %v235 = vadd.f32 %v233, %v234
      %v236 = vrcp.pop %v235
      %v237 = vmul.f32 %v235, %v236
      %v238 = vsub.f32 1.0, %v237
      %v239 = vmul.f32 %v236, %v238
      %v240 = vadd.f32 %v236, %v239
      %vm241 = vweird.f32 %v235
      %vm242 = vweird.f32 %v236
      %vm243 = vmor %vm241, %vm242
      %v244 = vsel %vm243, %v236, %v240
      %v245 = vand.u32 2147483647, %v235
      %vm246 = vcmp.eq.f32.partialorder %v245, 8.507059e+37
      %v247 = vand.u32 %v235, 2147483648
      %v248 = vor.u32 1.1754944e-38, %v247
      %v249 = vsel %vm246, %v248, %v244
      %v250 = vmul.f32 %v224, %v249
      %v251 = vmul.f32 %v226, %v249
      %254 = vrot.lane.b32.xlu0 %v250, 96
      %v255 = vpop.permute.xlu0 %254
      %256 = vrot.lane.b32.xlu0 %v251, 96
      %v257 = vpop.permute.xlu0 %256
      %260 = vxpose.xlu0.b32.start [1/16] %v255, 128
      %261 = vxpose.xlu0.b32.cont [2/16] %v257, 128
      %262 = vxpose.xlu0.b32.cont [3/16] 0.0, 128
      %263 = vxpose.xlu0.b32.cont [4/16] 0.0, 128
      %264 = vxpose.xlu0.b32.cont [5/16] 0.0, 128
      %265 = vxpose.xlu0.b32.cont [6/16] 0.0, 128
      %266 = vxpose.xlu0.b32.cont [7/16] 0.0, 128
      %267 = vxpose.xlu0.b32.cont [8/16] 0.0, 128
      %268 = vxpose.xlu0.b32.cont [9/16] 0.0, 128
      %269 = vxpose.xlu0.b32.cont [10/16] 0.0, 128
      %270 = vxpose.xlu0.b32.cont [11/16] 0.0, 128
      %271 = vxpose.xlu0.b32.cont [12/16] 0.0, 128
      %272 = vxpose.xlu0.b32.cont [13/16] 0.0, 128
      %273 = vxpose.xlu0.b32.cont [14/16] 0.0, 128
      %274 = vxpose.xlu0.b32.cont [15/16] 0.0, 128
      %275 = vxpose.xlu0.b32.end [16/16] 0.0, 128
      %v276 = vpop.trf.xlu0
      %v277 = vpop.trf.xlu0
      %v278 = vpop.trf.xlu0
      %v279 = vpop.trf.xlu0
      %v280 = vpop.trf.xlu0
      %v281 = vpop.trf.xlu0
      %v282 = vpop.trf.xlu0
      %v283 = vpop.trf.xlu0
      %v284 = vpop.trf.xlu0
      %v285 = vpop.trf.xlu0
      %v286 = vpop.trf.xlu0
      %v287 = vpop.trf.xlu0
      %v288 = vpop.trf.xlu0
      %v289 = vpop.trf.xlu0
      %v290 = vpop.trf.xlu0
      %v291 = vpop.trf.xlu0
      %294 = vrot.lane.b32.xlu0 %v206, 64
      %v295 = vpop.permute.xlu0 %294
      %296 = vrot.lane.b32.xlu0 %v209, 64
      %v297 = vpop.permute.xlu0 %296
      %vm300 = vcmask 130048
      %v302 = vsel %vm300, %v276, 0
      %v305 = vsel %vm300, %v277, 0
      %v308 = vsel %vm300, %v278, 0
      %v311 = vsel %vm300, %v279, 0
      %313 = vmatpush.msra.mxu0 0.0
      %314 = vmatpush.msra.mxu0 0.0
      %315 = vmatpush.msra.mxu0 0.0
      %316 = vmatpush.msra.mxu0 0.0
      %317 = vmatpush.msra.mxu0 0.0
      %318 = vmatpush.msra.mxu0 0.0
      %319 = vmatpush.msra.mxu0 0.0
      %320 = vmatpush.msra.mxu0 0.0
      %321 = vmatpush.msra.mxu0 0.0
      %322 = vmatpush.msra.mxu0 0.0
      %323 = vmatpush.msra.mxu0 0.0
      %324 = vmatpush.msra.mxu0 0.0
      %325 = vmatpush.msra.mxu0 0.0
      %326 = vmatpush.msra.mxu0 0.0
      %327 = vmatpush.msra.mxu0 %v297
      %328 = vmatpush.msra.mxu0 %v295
      %329 = vmatmul.f32.gmra.mxu0 %v302
      %v330 = vpop.f32.mrf.mxu0
      %v331 = vadd.f32 0.0, %v330
      %332 = vmatmul.f32.gmra.mxu0 %v305
      %v333 = vpop.f32.mrf.mxu0
      %v334 = vadd.f32 0.0, %v333
      %335 = vmatmul.f32.gmra.mxu0 %v308
      %v336 = vpop.f32.mrf.mxu0
      %v337 = vadd.f32 0.0, %v336
      %338 = vmatmul.f32.gmra.mxu0 %v311
      %v339 = vpop.f32.mrf.mxu0
      %v340 = vadd.f32 0.0, %v339
      %341 = vdwg.mxu0
      %v342 = vmul.f32 %v331, %v171
      %v343 = vmul.f32 %v334, %v172
      %v344 = vmul.f32 %v337, %v173
      %v345 = vmul.f32 %v340, %v174
      %v346 = vsel %vm181, %v206, -inf
      %347 = vmax.xlane.f32.xlu0 %v346
      %v348 = vpop.xlane.xlu0 %347
      %v349 = vsel %vm181, %v209, -inf
      %350 = vmax.xlane.f32.xlu0 %v349
      %v351 = vpop.xlane.xlu0 %350
      %v352 = vsub.f32 %v206, %v348
      %v353 = vsub.f32 %v209, %v351
      %v354 = vmul.f32 %v352, 1.442695
      %v355 = vpow.pop %v354
      %v356 = vmul.f32 %v353, 1.442695
      %v357 = vpow.pop %v356
      %v359 = vsel %vm181, %v355, 0
      %v362 = vsel %vm181, %v357, 0
      %364 = vmatpush.msra.mxu0 0.0
      %365 = vmatpush.msra.mxu0 0.0
      %366 = vmatpush.msra.mxu0 0.0
      %367 = vmatpush.msra.mxu0 0.0
      %368 = vmatpush.msra.mxu0 0.0
      %369 = vmatpush.msra.mxu0 0.0
      %370 = vmatpush.msra.mxu0 0.0
      %371 = vmatpush.msra.mxu0 0.0
      %372 = vmatpush.msra.mxu0 0.0
      %373 = vmatpush.msra.mxu0 0.0
      %374 = vmatpush.msra.mxu0 0.0
      %375 = vmatpush.msra.mxu0 0.0
      %376 = vmatpush.msra.mxu0 %v174
      %377 = vmatpush.msra.mxu0 %v173
      %378 = vmatpush.msra.mxu0 %v172
      %379 = vmatpush.msra.mxu0 %v171
      %380 = vmatmul.f32.gmra.mxu0 %v359
      %v381 = vpop.f32.mrf.mxu0
      %v382 = vadd.f32 0.0, %v381
      %383 = vmatmul.f32.gmra.mxu0 %v362
      %v384 = vpop.f32.mrf.mxu0
      %v385 = vadd.f32 0.0, %v384
      %386 = vdwg.mxu0
      %v387 = vmax.f32 %v382, 1e-30
      %v388 = vmax.f32 %v385, 1e-30
      %389 = vmatpush.msra.mxu0 0.0
      %390 = vmatpush.msra.mxu0 0.0
      %391 = vmatpush.msra.mxu0 0.0
      %392 = vmatpush.msra.mxu0 0.0
      %393 = vmatpush.msra.mxu0 0.0
      %394 = vmatpush.msra.mxu0 0.0
      %395 = vmatpush.msra.mxu0 0.0
      %396 = vmatpush.msra.mxu0 0.0
      %397 = vmatpush.msra.mxu0 0.0
      %398 = vmatpush.msra.mxu0 0.0
      %399 = vmatpush.msra.mxu0 0.0
      %400 = vmatpush.msra.mxu0 0.0
      %401 = vmatpush.msra.mxu0 %v345
      %402 = vmatpush.msra.mxu0 %v344
      %403 = vmatpush.msra.mxu0 %v343
      %404 = vmatpush.msra.mxu0 %v342
      %405 = vmatmul.f32.gmra.mxu0 %v359
      %v406 = vpop.f32.mrf.mxu0
      %v407 = vadd.f32 0.0, %v406
      %408 = vmatmul.f32.gmra.mxu0 %v362
      %v409 = vpop.f32.mrf.mxu0
      %v410 = vadd.f32 0.0, %v409
      %411 = vdwg.mxu0
      %v412 = vrcp.pop %v387
      %v413 = vmul.f32 %v387, %v412
      %v414 = vsub.f32 1.0, %v413
      %v415 = vmul.f32 %v412, %v414
      %v416 = vadd.f32 %v412, %v415
      %vm417 = vweird.f32 %v387
      %vm418 = vweird.f32 %v412
      %vm419 = vmor %vm417, %vm418
      %v420 = vsel %vm419, %v412, %v416
      %v421 = vand.u32 2147483647, %v387
      %vm422 = vcmp.eq.f32.partialorder %v421, 8.507059e+37
      %v423 = vand.u32 %v387, 2147483648
      %v424 = vor.u32 1.1754944e-38, %v423
      %v425 = vsel %vm422, %v424, %v420
      %v426 = vrcp.pop %v388
      %v427 = vmul.f32 %v388, %v426
      %v428 = vsub.f32 1.0, %v427
      %v429 = vmul.f32 %v426, %v428
      %v430 = vadd.f32 %v426, %v429
      %vm431 = vweird.f32 %v388
      %vm432 = vweird.f32 %v426
      %vm433 = vmor %vm431, %vm432
      %v434 = vsel %vm433, %v426, %v430
      %v435 = vand.u32 2147483647, %v388
      %vm436 = vcmp.eq.f32.partialorder %v435, 8.507059e+37
      %v437 = vand.u32 %v388, 2147483648
      %v438 = vor.u32 1.1754944e-38, %v437
      %v439 = vsel %vm436, %v438, %v434
      %v440 = vmul.f32 %v407, %v425
      %v441 = vmul.f32 %v410, %v439
      %442 = vst.msk [vmem:[%s170] sm:$0xff] %vm181, %v440
      %443 = vst.msk [vmem:[%s170 + $0x8] sm:$0xff] %vm181, %v441
      %p444 = scmp.lt.s32.totalorder %s14, 1
      %s445 = scalar_select %p444, %s14, 1
      %s446 = smul.addr %s445, 2
      %s447 = smul.addr %s446, 8
      %s448 = scalar_lea.vmem %s3, %s447
      // Predicated region
      $region33: #{linear_attention.2} parent=31 // pred_check
        %p449 = pneg %p100
      $region34: #{linear_attention.2} parent=31 // pred_check_branch
        %451 = sbr.rel (%p449) target = $region36
      $region35: #{linear_attention.2} parent=31 // pred_region
        _
      $region36: #{linear_attention.2} parent=31 // pred_fallthru
        _
    $region32: #{linear_attention.2} parent=5 // pred_fallthru
      _
    %p452 = scmp.le.s32.totalorder 2, %s9
    // Predicated region
    $region37: #{linear_attention.2} parent=5 // pred_check
      %p453 = pneg %p452
    $region38: #{linear_attention.2} parent=5 // pred_check_branch
      %455 = sbr.rel (%p453) target = $region40
    $region39: #{linear_attention.2} parent=5 // pred_region
      %s456 = ssub.s32 %s9, 2
      // Predicated region
      $region41: #{linear_attention.2} parent=39 // pred_check
        %p457 = pneg %p106
      $region42: #{linear_attention.2} parent=39 // pred_check_branch
        %459 = sbr.rel (%p457) target = $region44
      $region43: #{linear_attention.2} parent=39 // pred_region
        %p460 = scmp.lt.s32.totalorder %s15, 1
        %s461 = scalar_select %p460, %s15, 1
        %s462 = smul.addr %s461, 2
        %s463 = smul.addr %s462, 8
        %s464 = scalar_lea.vmem %s3, %s463
      $region44: #{linear_attention.2} parent=39 // pred_fallthru
        _
    $region40: #{linear_attention.2} parent=5 // pred_fallthru
      _
  $region6: #{linear_attention.2} parent=0 // loop_footer
    %s13 = sadd.s32 1, %s9
  $region7: #{linear_attention.2} parent=0 // loop_footer_branch
    %8 = sbr.rel target = $region3
  $region8: #{linear_attention.2} parent=0 // loop_exit
    _

</llo_original>
